<compile_context>
chip_gen: v7x
topology: tpu7x:2x2x1
jax: 0.10.0
libtpu: 0.0.40
codegen_flags: <defaults>
</compile_context>

<pallas_src>
import jax
import jax.numpy as jnp
from jax.experimental import pallas as pl
from jax.experimental.pallas import tpu as pltpu


def _round_up(x, m):
    return ((x + m - 1) // m) * m


# ----------------------------------------------------------------------------
# Kernel: one (branch, row-tile) grid point.
# ----------------------------------------------------------------------------
def _mlp_fused_kernel(x_ref, w1_ref, b1_ref, w2_ref, b2_ref, o_ref):
    x = x_ref[0]                                           # (TILE_N, Din_pad)
    # Linear1 with BatchNorm pre-folded into (w1', b1').
    h = jnp.dot(x, w1_ref[0], preferred_element_type=jnp.float32) + b1_ref[0]
    h = jnp.maximum(h, 0.0)                                # ReLU
    # Dropout -> identity (eval mode).
    out = jnp.dot(h, w2_ref[0], preferred_element_type=jnp.float32) + b2_ref[0]
    # F.normalize(p=2, dim=1): out / max(||out||, 1e-12)
    #   == out * rsqrt(max(sum(out^2), 1e-24))   (EUP rsqrt, no VPU divide)
    sumsq = jnp.sum(out * out, axis=1, keepdims=True)
    o_ref[0] = out * jax.lax.rsqrt(jnp.maximum(sumsq, 1e-24))


# ----------------------------------------------------------------------------
# Host-side helpers
# ----------------------------------------------------------------------------
def _fold_bn(params, eps=1e-5):
    """Fold eval-mode BatchNorm1d into the preceding Linear."""
    w1, b1, gamma, beta, mean, var, w2, b2 = params
    scale = gamma * jax.lax.rsqrt(var + eps)               # (1, H)
    w1f = w1 * scale                                       # (Din, H) * (1, H)
    b1f = (b1 - mean) * scale + beta                       # (1, H)
    return w1f, b1f, w2, b2


def _pad2(a, rows, cols):
    return jnp.pad(a, ((0, rows - a.shape[0]), (0, cols - a.shape[1])))


def mlp_forward(x, y, feat_params, target_params):
    """Fused two-branch MLP forward (eval mode) via one pallas_call."""
    N = x.shape[0]
    assert y.shape[0] == N
    d_out = feat_params[-2].shape[1]
    assert target_params[-2].shape[1] == d_out

    w1f_a, b1f_a, w2_a, b2_a = _fold_bn(feat_params)
    w1f_b, b1f_b, w2_b, b2_b = _fold_bn(target_params)

    # Lane-dense (multiple-of-128) feature dims; common padded shapes so the
    # two branches can be stacked behind a grid=(2, ...) branch axis.
    din_pad = _round_up(max(x.shape[1], y.shape[1]), 128)
    h_pad = _round_up(max(w1f_a.shape[1], w1f_b.shape[1]), 128)
    dout_pad = _round_up(d_out, 128)

    # Row tiling over the batch. Keep tiles <= 512 rows (comfortably inside
    # v7x's 64 MiB physical VMEM even with double-buffering at these widths).
    tile_n = min(512, _round_up(N, 8))
    n_pad = _round_up(N, tile_n)

    # Zero padding is semantics-preserving: padded input columns hit zero
    # weight rows, padded hidden/output columns have zero weights and biases,
    # so the L2 norm over dim=1 is unchanged.
    xs = jnp.stack([_pad2(x, n_pad, din_pad), _pad2(y, n_pad, din_pad)])
    w1s = jnp.stack([_pad2(w1f_a, din_pad, h_pad),
                     _pad2(w1f_b, din_pad, h_pad)])
    b1s = jnp.stack([_pad2(b1f_a, 1, h_pad), _pad2(b1f_b, 1, h_pad)])
    w2s = jnp.stack([_pad2(w2_a, h_pad, dout_pad),
                     _pad2(w2_b, h_pad, dout_pad)])
    b2s = jnp.stack([_pad2(b2_a, 1, dout_pad), _pad2(b2_b, 1, dout_pad)])

    grid = (2, n_pad // tile_n)
    out = pl.pallas_call(
        _mlp_fused_kernel,
        out_shape=jax.ShapeDtypeStruct((2, n_pad, dout_pad), jnp.float32),
        grid=grid,
        in_specs=[
            pl.BlockSpec((1, tile_n, din_pad), lambda b, i: (b, i, 0)),
            pl.BlockSpec((1, din_pad, h_pad), lambda b, i: (b, 0, 0)),
            pl.BlockSpec((1, 1, h_pad), lambda b, i: (b, 0, 0)),
            pl.BlockSpec((1, h_pad, dout_pad), lambda b, i: (b, 0, 0)),
            pl.BlockSpec((1, 1, dout_pad), lambda b, i: (b, 0, 0)),
        ],
        out_specs=pl.BlockSpec((1, tile_n, dout_pad), lambda b, i: (b, i, 0)),
        compiler_params=pltpu.CompilerParams(
            dimension_semantics=("parallel", "parallel")),
    )(xs, w1s, b1s, w2s, b2s)

    features = out[0, :N, :d_out]
    targets = out[1, :N, :d_out]
    return features, targets


# ----------------------------------------------------------------------------
# Parameter construction (matches PyTorch init: xavier_uniform weights,
# zero biases; BN params as a model would carry after training/eval).
# ----------------------------------------------------------------------------
def xavier_uniform(key, d_in, d_out):
    bound = (6.0 / (d_in + d_out)) ** 0.5
    return jax.random.uniform(key, (d_in, d_out), jnp.float32, -bound, bound)


def make_branch_params(key, d_in, hidden, d_out):
    k1, k2, k3, k4, k5, k6 = jax.random.split(key, 6)
    w1 = xavier_uniform(k1, d_in, hidden)
    b1 = jnp.zeros((1, hidden), jnp.float32)
    # Non-trivial BN params/stats so the host-side fold is exercised.
    gamma = jax.random.uniform(k3, (1, hidden), jnp.float32, 0.5, 1.5)
    beta = 0.1 * jax.random.normal(k4, (1, hidden), jnp.float32)
    running_mean = 0.1 * jax.random.normal(k5, (1, hidden), jnp.float32)
    running_var = jax.random.uniform(k6, (1, hidden), jnp.float32, 0.5, 1.5)
    w2 = xavier_uniform(k2, hidden, d_out)
    b2 = jnp.zeros((1, d_out), jnp.float32)
    return (w1, b1, gamma, beta, running_mean, running_var, w2, b2)


# Pure-JAX reference (eval-mode semantics) for correctness checking.
def _ref_branch(x, params):
    w1, b1, gamma, beta, mean, var, w2, b2 = params
    h = x @ w1 + b1
    h = (h - mean) * jax.lax.rsqrt(var + 1e-5) * gamma + beta
    h = jnp.maximum(h, 0.0)
    out = h @ w2 + b2
    norm = jnp.sqrt(jnp.sum(out * out, axis=1, keepdims=True))
    return out / jnp.maximum(norm, 1e-12)


if __name__ == "__main__":
    batch = 8
    input_dim_feat = 16
    input_dim_target = 12
    hidden_dim_feat = 32
    hidden_dim_target = 24
    output_dim = 8

    key = jax.random.PRNGKey(0)
    kx, ky, kf, kt = jax.random.split(key, 4)

    x = jax.random.normal(kx, (batch, input_dim_feat), jnp.float32)
    y = jax.random.normal(ky, (batch, input_dim_target), jnp.float32)

    feat_params = make_branch_params(kf, input_dim_feat, hidden_dim_feat,
                                     output_dim)
    target_params = make_branch_params(kt, input_dim_target,
                                       hidden_dim_target, output_dim)

    features, targets = mlp_forward(x, y, feat_params, target_params)
    jax.block_until_ready((features, targets))

    # Correctness vs. pure-JAX eval-mode reference.
    ref_f = _ref_branch(x, feat_params)
    ref_t = _ref_branch(y, target_params)
    assert features.shape == (batch, output_dim)
    assert targets.shape == (batch, output_dim)
    assert bool(jnp.allclose(features, ref_f, atol=1e-5, rtol=1e-5))
    assert bool(jnp.allclose(targets, ref_t, atol=1e-5, rtol=1e-5))
    assert bool(jnp.allclose(jnp.linalg.norm(features, axis=1), 1.0,
                             atol=1e-4))
    assert bool(jnp.allclose(jnp.linalg.norm(targets, axis=1), 1.0,
                             atol=1e-4))

    print("KERNEL_OK")
</pallas_src>

<mosaic_0001>
module attributes {stable_mosaic.version = 11 : i64} {
  func.func @_mlp_fused_kernel(%arg0: i32, %arg1: i32, %arg2: memref<1x8x128xf32, #tpu.memory_space<vmem>>, %arg3: memref<1x128x128xf32, #tpu.memory_space<vmem>>, %arg4: memref<1x1x128xf32, #tpu.memory_space<vmem>>, %arg5: memref<1x128x128xf32, #tpu.memory_space<vmem>>, %arg6: memref<1x1x128xf32, #tpu.memory_space<vmem>>, %arg7: memref<1x8x128xf32, #tpu.memory_space<vmem>>) attributes {dimension_semantics = [#tpu.dimension_semantics<parallel>, #tpu.dimension_semantics<parallel>], iteration_bounds = array<i64: 2, 1>, scalar_prefetch = 0 : i64, scratch_operands = 0 : i64, tpu.core_type = #tpu.core_type<tc>, window_params = [{transform_indices = @transform_0, window_bounds = array<i64: 1, 8, 128>}, {transform_indices = @transform_1, window_bounds = array<i64: 1, 128, 128>}, {transform_indices = @transform_2, window_bounds = array<i64: 1, 1, 128>}, {transform_indices = @transform_3, window_bounds = array<i64: 1, 128, 128>}, {transform_indices = @transform_4, window_bounds = array<i64: 1, 1, 128>}, {transform_indices = @transform_5, window_bounds = array<i64: 1, 8, 128>}]} {
    %c0 = arith.constant 0 : index
    %c0_0 = arith.constant 0 : index
    %c0_1 = arith.constant 0 : index
    %0 = vector.load %arg2[%c0, %c0_0, %c0_1] : memref<1x8x128xf32, #tpu.memory_space<vmem>>, vector<1x8x128xf32>
    %1 = vector.shape_cast %0 : vector<1x8x128xf32> to vector<8x128xf32>
    %c0_2 = arith.constant 0 : index
    %c0_3 = arith.constant 0 : index
    %c0_4 = arith.constant 0 : index
    %2 = vector.load %arg3[%c0_2, %c0_3, %c0_4] : memref<1x128x128xf32, #tpu.memory_space<vmem>>, vector<1x128x128xf32>
    %3 = vector.shape_cast %2 : vector<1x128x128xf32> to vector<128x128xf32>
    %cst = arith.constant dense<0.000000e+00> : vector<8x128xf32>
    %4 = tpu.matmul %1, %3, %cst {dimension_numbers = #tpu.dot_dimension_numbers<[1], [0], [0], [1], [0, 0, 1, 1], [], []>} : vector<8x128xf32>, vector<128x128xf32>, vector<8x128xf32> -> vector<8x128xf32>
    %c0_5 = arith.constant 0 : index
    %c0_6 = arith.constant 0 : index
    %c0_7 = arith.constant 0 : index
    %5 = vector.load %arg4[%c0_5, %c0_6, %c0_7] : memref<1x1x128xf32, #tpu.memory_space<vmem>>, vector<1x1x128xf32>
    %6 = vector.shape_cast %5 : vector<1x1x128xf32> to vector<1x128xf32>
    %7 = vector.broadcast %6 : vector<1x128xf32> to vector<8x128xf32>
    %8 = arith.addf %4, %7 : vector<8x128xf32>
    %cst_8 = arith.constant 0.000000e+00 : f32
    %9 = vector.broadcast %cst_8 : f32 to vector<8x128xf32>
    %10 = arith.maximumf %8, %9 : vector<8x128xf32>
    %c0_9 = arith.constant 0 : index
    %c0_10 = arith.constant 0 : index
    %c0_11 = arith.constant 0 : index
    %11 = vector.load %arg5[%c0_9, %c0_10, %c0_11] : memref<1x128x128xf32, #tpu.memory_space<vmem>>, vector<1x128x128xf32>
    %12 = vector.shape_cast %11 : vector<1x128x128xf32> to vector<128x128xf32>
    %cst_12 = arith.constant dense<0.000000e+00> : vector<8x128xf32>
    %13 = tpu.matmul %10, %12, %cst_12 {dimension_numbers = #tpu.dot_dimension_numbers<[1], [0], [0], [1], [0, 0, 1, 1], [], []>} : vector<8x128xf32>, vector<128x128xf32>, vector<8x128xf32> -> vector<8x128xf32>
    %c0_13 = arith.constant 0 : index
    %c0_14 = arith.constant 0 : index
    %c0_15 = arith.constant 0 : index
    %14 = vector.load %arg6[%c0_13, %c0_14, %c0_15] : memref<1x1x128xf32, #tpu.memory_space<vmem>>, vector<1x1x128xf32>
    %15 = vector.shape_cast %14 : vector<1x1x128xf32> to vector<1x128xf32>
    %16 = vector.broadcast %15 : vector<1x128xf32> to vector<8x128xf32>
    %17 = arith.addf %13, %16 : vector<8x128xf32>
    %18 = arith.mulf %17, %17 : vector<8x128xf32>
    %cst_16 = arith.constant dense<0.000000e+00> : vector<8xf32>
    %19 = vector.multi_reduction <add>, %18, %cst_16 [1] : vector<8x128xf32> to vector<8xf32>
    %20 = vector.shape_cast %19 : vector<8xf32> to vector<8x1xf32>
    %cst_17 = arith.constant 1.000000e-24 : f32
    %21 = vector.broadcast %cst_17 : f32 to vector<8x1xf32>
    %22 = arith.maximumf %20, %21 : vector<8x1xf32>
    %23 = math.rsqrt %22 : vector<8x1xf32>
    %24 = vector.broadcast %23 : vector<8x1xf32> to vector<8x128xf32>
    %25 = arith.mulf %17, %24 : vector<8x128xf32>
    %c0_18 = arith.constant 0 : index
    %c0_19 = arith.constant 0 : index
    %c0_20 = arith.constant 0 : index
    %26 = vector.load %arg7[%c0_18, %c0_19, %c0_20] : memref<1x8x128xf32, #tpu.memory_space<vmem>>, vector<1x8x128xf32>
    %27 = vector.shape_cast %26 : vector<1x8x128xf32> to vector<8x128xf32>
    %28 = vector.shape_cast %25 : vector<8x128xf32> to vector<1x8x128xf32>
    tpu.vector_store %arg7[%c0_18, %c0_19, %c0_20], %28 {strides = array<i32>} : memref<1x8x128xf32, #tpu.memory_space<vmem>>, vector<1x8x128xf32>,
    return
  }
  func.func @transform_0(%arg0: i32, %arg1: i32) -> (i32, i32, i32) {
    %c0_i32 = arith.constant 0 : i32
    %c0_i32_0 = arith.constant 0 : i32
    return %arg0, %arg1, %c0_i32 : i32, i32, i32
  }
  func.func @transform_1(%arg0: i32, %arg1: i32) -> (i32, i32, i32) {
    %c0_i32 = arith.constant 0 : i32
    %c0_i32_0 = arith.constant 0 : i32
    %c0_i32_1 = arith.constant 0 : i32
    return %arg0, %c0_i32, %c0_i32_0 : i32, i32, i32
  }
  func.func @transform_2(%arg0: i32, %arg1: i32) -> (i32, i32, i32) {
    %c0_i32 = arith.constant 0 : i32
    %c0_i32_0 = arith.constant 0 : i32
    %c0_i32_1 = arith.constant 0 : i32
    return %arg0, %c0_i32, %c0_i32_0 : i32, i32, i32
  }
  func.func @transform_3(%arg0: i32, %arg1: i32) -> (i32, i32, i32) {
    %c0_i32 = arith.constant 0 : i32
    %c0_i32_0 = arith.constant 0 : i32
    %c0_i32_1 = arith.constant 0 : i32
    return %arg0, %c0_i32, %c0_i32_0 : i32, i32, i32
  }
  func.func @transform_4(%arg0: i32, %arg1: i32) -> (i32, i32, i32) {
    %c0_i32 = arith.constant 0 : i32
    %c0_i32_0 = arith.constant 0 : i32
    %c0_i32_1 = arith.constant 0 : i32
    return %arg0, %c0_i32, %c0_i32_0 : i32, i32, i32
  }
  func.func @transform_5(%arg0: i32, %arg1: i32) -> (i32, i32, i32) {
    %c0_i32 = arith.constant 0 : i32
    %c0_i32_0 = arith.constant 0 : i32
    return %arg0, %arg1, %c0_i32 : i32, i32, i32
  }
}

</mosaic_0001>

<llo_original>
// kernel: tpu_custom_call.1
$region0: #{tpu_custom_call.1}
  #allocation0 [shape = 'u32[]', space=smem, size = 0x4, offset = 0x4, fixed_abs, tag = 'smem constant byte address 0x4 - core index']
  #allocation1 [shape = 'u32[144,128]{1,0:T(1,128)}', space=vmem, size = 0x12000, scoped, tag = 'internal scratch']
  %s0 = inlined_call_operand.hbm [shape: f32[2,8,128], index: 0, kind: input, shape index: {}]
  %s1 = inlined_call_operand.hbm [shape: f32[2,128,128], index: 1, kind: input, shape index: {}]
  %s2 = inlined_call_operand.vmem [shape: f32[2,1,128], index: 2, kind: input, shape index: {}]
  %s3 = inlined_call_operand.hbm [shape: f32[2,128,128], index: 3, kind: input, shape index: {}]
  %s4 = inlined_call_operand.vmem [shape: f32[2,1,128], index: 4, kind: input, shape index: {}]
  %s5 = inlined_call_operand.hbm [shape: f32[2,8,128], index: 5, kind: output, shape index: {}]
  %s6 = sld [smem:[#allocation0]]
  $region65: #{tpu_custom_call.1} parent=0
    _
  %s8 = ssub.s32 1, %s6
  %s9 = scalar_select 0, %s8, %s6
  $region1: #{tpu_custom_call.1} parent=0
    #allocation2 [shape = 'u8[8192]{0}', space=vmem, size = 0x2000, scoped, tag = 'input window, operand 0']
    #allocation3 [shape = 's32[2]{0}', space=sflag, size = 0x8, scoped, tag = 'scoped memory for tpu_custom_call.1']
    #allocation4 [shape = 's32[2]{0}', space=sflag, size = 0x8, scoped, tag = 'scoped memory for tpu_custom_call.1']
    #allocation5 [shape = 'u8[131072]{0}', space=vmem, size = 0x20000, scoped, tag = 'input window, operand 1']
    #allocation6 [shape = 's32[2]{0}', space=sflag, size = 0x8, scoped, tag = 'scoped memory for tpu_custom_call.1']
    #allocation7 [shape = 'u8[131072]{0}', space=vmem, size = 0x20000, scoped, tag = 'input window, operand 3']
    #allocation8 [shape = 'u8[8192]{0}', space=vmem, size = 0x2000, scoped, tag = 'output window, operand 0']
    %10 = vsyncpa [#allocation3], 0
    %s11 = scalar_lea.sflag [#allocation3], 1
    %12 = vsyncpa %s11, 0
    %13 = vsyncpa [#allocation6], 0
    %s14 = scalar_lea.sflag [#allocation6], 1
    %15 = vsyncpa %s14, 0
    %16 = vsyncpa [#allocation4], 0
    %s17 = scalar_lea.sflag [#allocation4], 1
    %18 = vsyncpa %s17, 0
    loop: start=0, step=1, limit=4
    $region2: #{tpu_custom_call.1} parent=1 // loop_pre_header
      _
    $region3: #{tpu_custom_call.1} parent=1 // loop_header
      %s20 = sphi 0, %s24
      %p21 = scmp.ge.s32.totalorder %s20, 4
      %s27 = sphi 0, %s39
      %s28 = sphi 0, %s35
      %s29 = sphi 0, %s27
      %s30 = sphi 0, %s28
      %s31 = sphi 0, %s29
      %s32 = sphi 0, %s30
      %s44 = sphi 0, %s46
      %s47 = sphi 0, %s44
      %s48 = sphi 0, %s47
      %s64 = sphi 0, %s48
      %s70 = sphi 0, %s72
      %s73 = sphi 0, %s70
      %s74 = sphi 0, %s73
      %s90 = sphi 0, %s74
      %s96 = sphi 0, %s98
      %s99 = sphi 0, %s96
      %s100 = sphi 0, %s99
      %s116 = sphi 0, %s100
      %s122 = sphi 0, %s124
      %s125 = sphi 0, %s122
      %s126 = sphi 0, %s125
      %s142 = sphi 0, %s126
      %s148 = sphi 0, %s150
      %s151 = sphi 0, %s148
      %s152 = sphi 0, %s151
      %s168 = sphi 0, %s152
      %s176 = sphi 0, %s178
      %s179 = sphi 0, %s176
      %s180 = sphi 0, %s179
      %s196 = sphi 0, %s180
    $region4: #{tpu_custom_call.1} parent=1 // loop_header_branch
      %23 = sbr.rel (%p21) target = $region8
    $region5: #{tpu_custom_call.1} parent=1 // loop_body
      %s25 = ssub.s32 %s20, 1
      %s26 = ssub.s32 %s20, 2
      %s33 = sadd.s32 1, %s28
      %p34 = scmp.ge.s32.totalorder %s33, 1
      %s35 = scalar_select %p34, 0, %s33
      %s36 = sadd.s32 1, %s27
      %s37 = scalar_select %p34, %s36, %s27
      %p38 = scmp.ge.s32.totalorder %s37, 2
      %s39 = scalar_select %p38, 0, %s37
      %s40 = ssub.s32 %s27, %s39
      %s41 = ssub.s32 %s28, %s35
      %s42 = sor.u32 %s40, %s41
      %p43 = scmp.eq.s32.totalorder %s42, 0
      %s45 = sadd.s32 %s44, 1
      %s46 = scalar_select %p43, %s44, %s45
      %p49 = pneg %p43
      %p50 = scmp.eq.s32.totalorder %s20, 1
      %p51 = por %p49, %p50
      %p52 = scmp.ne.s32.totalorder %s44, %s47
      %p53 = scmp.eq.s32.totalorder %s20, 0
      %p54 = por %p52, %p53
      %p55 = scmp.ne.s32.totalorder %s44, %s47
      %p56 = scmp.eq.s32.totalorder %s25, 1
      %p57 = por %p55, %p56
      %p58 = scmp.ne.s32.totalorder %s47, %s48
      %p59 = scmp.eq.s32.totalorder %s25, 0
      %p60 = por %p58, %p59
      %p61 = scmp.ne.s32.totalorder %s47, %s48
      %p62 = scmp.eq.s32.totalorder %s26, 1
      %p63 = por %p61, %p62
      %p65 = scmp.ne.s32.totalorder %s48, %s64
      %p66 = scmp.eq.s32.totalorder %s26, 0
      %p67 = por %p65, %p66
      %s68 = ssub.s32 %s27, %s39
      %p69 = scmp.eq.s32.totalorder %s68, 0
      %s71 = sadd.s32 %s70, 1
      %s72 = scalar_select %p69, %s70, %s71
      %p75 = pneg %p69
      %p76 = scmp.eq.s32.totalorder %s20, 1
      %p77 = por %p75, %p76
      %p78 = scmp.ne.s32.totalorder %s70, %s73
      %p79 = scmp.eq.s32.totalorder %s20, 0
      %p80 = por %p78, %p79
      %p81 = scmp.ne.s32.totalorder %s70, %s73
      %p82 = scmp.eq.s32.totalorder %s25, 1
      %p83 = por %p81, %p82
      %p84 = scmp.ne.s32.totalorder %s73, %s74
      %p85 = scmp.eq.s32.totalorder %s25, 0
      %p86 = por %p84, %p85
      %p87 = scmp.ne.s32.totalorder %s73, %s74
      %p88 = scmp.eq.s32.totalorder %s26, 1
      %p89 = por %p87, %p88
      %p91 = scmp.ne.s32.totalorder %s74, %s90
      %p92 = scmp.eq.s32.totalorder %s26, 0
      %p93 = por %p91, %p92
      %s94 = ssub.s32 %s27, %s39
      %p95 = scmp.eq.s32.totalorder %s94, 0
      %s97 = sadd.s32 %s96, 1
      %s98 = scalar_select %p95, %s96, %s97
      %p101 = pneg %p95
      %p102 = scmp.eq.s32.totalorder %s20, 1
      %p103 = por %p101, %p102
      %p104 = scmp.ne.s32.totalorder %s96, %s99
      %p105 = scmp.eq.s32.totalorder %s20, 0
      %p106 = por %p104, %p105
      %p107 = scmp.ne.s32.totalorder %s96, %s99
      %p108 = scmp.eq.s32.totalorder %s25, 1
      %p109 = por %p107, %p108
      %p110 = scmp.ne.s32.totalorder %s99, %s100
      %p111 = scmp.eq.s32.totalorder %s25, 0
      %p112 = por %p110, %p111
      %p113 = scmp.ne.s32.totalorder %s99, %s100
      %p114 = scmp.eq.s32.totalorder %s26, 1
      %p115 = por %p113, %p114
      %p117 = scmp.ne.s32.totalorder %s100, %s116
      %p118 = scmp.eq.s32.totalorder %s26, 0
      %p119 = por %p117, %p118
      %s120 = ssub.s32 %s27, %s39
      %p121 = scmp.eq.s32.totalorder %s120, 0
      %s123 = sadd.s32 %s122, 1
      %s124 = scalar_select %p121, %s122, %s123
      %p127 = pneg %p121
      %p128 = scmp.eq.s32.totalorder %s20, 1
      %p129 = por %p127, %p128
      %p130 = scmp.ne.s32.totalorder %s122, %s125
      %p131 = scmp.eq.s32.totalorder %s20, 0
      %p132 = por %p130, %p131
      %p133 = scmp.ne.s32.totalorder %s122, %s125
      %p134 = scmp.eq.s32.totalorder %s25, 1
      %p135 = por %p133, %p134
      %p136 = scmp.ne.s32.totalorder %s125, %s126
      %p137 = scmp.eq.s32.totalorder %s25, 0
      %p138 = por %p136, %p137
      %p139 = scmp.ne.s32.totalorder %s125, %s126
      %p140 = scmp.eq.s32.totalorder %s26, 1
      %p141 = por %p139, %p140
      %p143 = scmp.ne.s32.totalorder %s126, %s142
      %p144 = scmp.eq.s32.totalorder %s26, 0
      %p145 = por %p143, %p144
      %s146 = ssub.s32 %s27, %s39
      %p147 = scmp.eq.s32.totalorder %s146, 0
      %s149 = sadd.s32 %s148, 1
      %s150 = scalar_select %p147, %s148, %s149
      %p153 = pneg %p147
      %p154 = scmp.eq.s32.totalorder %s20, 1
      %p155 = por %p153, %p154
      %p156 = scmp.ne.s32.totalorder %s148, %s151
      %p157 = scmp.eq.s32.totalorder %s20, 0
      %p158 = por %p156, %p157
      %p159 = scmp.ne.s32.totalorder %s148, %s151
      %p160 = scmp.eq.s32.totalorder %s25, 1
      %p161 = por %p159, %p160
      %p162 = scmp.ne.s32.totalorder %s151, %s152
      %p163 = scmp.eq.s32.totalorder %s25, 0
      %p164 = por %p162, %p163
      %p165 = scmp.ne.s32.totalorder %s151, %s152
      %p166 = scmp.eq.s32.totalorder %s26, 1
      %p167 = por %p165, %p166
      %p169 = scmp.ne.s32.totalorder %s152, %s168
      %p170 = scmp.eq.s32.totalorder %s26, 0
      %p171 = por %p169, %p170
      %s172 = ssub.s32 %s27, %s39
      %s173 = ssub.s32 %s28, %s35
      %s174 = sor.u32 %s172, %s173
      %p175 = scmp.eq.s32.totalorder %s174, 0
      %s177 = sadd.s32 %s176, 1
      %s178 = scalar_select %p175, %s176, %s177
      %p181 = pneg %p175
      %p182 = scmp.eq.s32.totalorder %s20, 1
      %p183 = por %p181, %p182
      %p184 = scmp.ne.s32.totalorder %s176, %s179
      %p185 = scmp.eq.s32.totalorder %s20, 0
      %p186 = por %p184, %p185
      %p187 = scmp.ne.s32.totalorder %s176, %s179
      %p188 = scmp.eq.s32.totalorder %s25, 1
      %p189 = por %p187, %p188
      %p190 = scmp.ne.s32.totalorder %s179, %s180
      %p191 = scmp.eq.s32.totalorder %s25, 0
      %p192 = por %p190, %p191
      %p193 = scmp.ne.s32.totalorder %s179, %s180
      %p194 = scmp.eq.s32.totalorder %s26, 1
      %p195 = por %p193, %p194
      %p197 = scmp.ne.s32.totalorder %s180, %s196
      %p198 = scmp.eq.s32.totalorder %s26, 0
      %p199 = por %p197, %p198
      %p200 = scmp.le.s32.totalorder 1, %s20
      %p201 = scmp.lt.s32.totalorder %s20, 3
      %p202 = pnand %p200, %p201
      %p203 = pneg %p202
      // Predicated region
      $region9: #{tpu_custom_call.1} parent=5 // pred_check
        _
      $region10: #{tpu_custom_call.1} parent=5 // pred_check_branch
        %205 = sbr.rel (%p202) target = $region12
      $region11: #{tpu_custom_call.1} parent=5 // pred_region
        %s206 = ssub.s32 %s20, 1
      $region12: #{tpu_custom_call.1} parent=5 // pred_fallthru
        _
      %p207 = scmp.lt.s32.totalorder %s20, 2
      // Predicated region
      $region13: #{tpu_custom_call.1} parent=5 // pred_check
        %p208 = pneg %p207
      $region14: #{tpu_custom_call.1} parent=5 // pred_check_branch
        %210 = sbr.rel (%p208) target = $region16
      $region15: #{tpu_custom_call.1} parent=5 // pred_region
        // Predicated region
        $region17: #{tpu_custom_call.1} parent=15 // pred_check
          %p211 = pneg %p54
        $region18: #{tpu_custom_call.1} parent=15 // pred_check_branch
          %213 = sbr.rel (%p211) target = $region20
        $region19: #{tpu_custom_call.1} parent=15 // pred_region
          %s214 = sand.u32 %s44, 1
          %s215 = scalar_lea.sflag [#allocation3], %s214
          %s216 = sand.u32 %s44, 1
          %s217 = smul.addr %s216, 8
          %s218 = scalar_lea.vmem [#allocation2], %s217
          %s220 = ssub.s32 128, 128
          %221 = vsyncadd %s215, %s220
          %s222 = sadd.s32 %s28, %s27
          %s223 = smul.addr %s222, 128
          %s224 = scalar_lea.hbm %s0, %s223
          %s226 = sshll.u32 %s218, 4
          %s227 = int_to_ptr.vmem [resolvable:$true] %s226
          %229 = dma.hbm_to_vmem [thread:$0]  %s224, 128, %s227, %s215
        $region20: #{tpu_custom_call.1} parent=15 // pred_fallthru
          _
        // Predicated region
        $region21: #{tpu_custom_call.1} parent=15 // pred_check
          %p230 = pneg %p80
        $region22: #{tpu_custom_call.1} parent=15 // pred_check_branch
          %232 = sbr.rel (%p230) target = $region24
        $region23: #{tpu_custom_call.1} parent=15 // pred_region
          %s233 = sand.u32 %s20, 1
          %s234 = scalar_lea.sflag [#allocation6], %s233
          %s235 = sand.u32 %s70, 1
          %s236 = smul.addr %s235, 128
          %s237 = scalar_lea.vmem [#allocation5], %s236
          %s239 = ssub.s32 2048, 2048
          %240 = vsyncadd %s234, %s239
          %s241 = smul.addr %s27, 16
          %s242 = smul.addr %s241, 128
          %s243 = scalar_lea.hbm %s1, %s242
          %s244 = sshll.u32 %s237, 4
          %s245 = int_to_ptr.vmem [resolvable:$true] %s244
          %250 = dma.hbm_to_vmem [thread:$0]  %s243, 2048, %s245, %s234, 128, 128, 8
        $region24: #{tpu_custom_call.1} parent=15 // pred_fallthru
          _
        // Predicated region
        $region25: #{tpu_custom_call.1} parent=15 // pred_check
          %p251 = pneg %p106
        $region26: #{tpu_custom_call.1} parent=15 // pred_check_branch
          %253 = sbr.rel (%p251) target = $region28
        $region27: #{tpu_custom_call.1} parent=15 // pred_region
          %p254 = scmp.lt.s32.totalorder %s27, 1
          %s255 = scalar_select %p254, %s27, 1
          %s256 = scalar_lea.vmem %s2, %s255
        $region28: #{tpu_custom_call.1} parent=15 // pred_fallthru
          _
        // Predicated region
        $region29: #{tpu_custom_call.1} parent=15 // pred_check
          %p257 = pneg %p132
        $region30: #{tpu_custom_call.1} parent=15 // pred_check_branch
          %259 = sbr.rel (%p257) target = $region32
        $region31: #{tpu_custom_call.1} parent=15 // pred_region
          %s260 = sand.u32 %s20, 1
          %s261 = scalar_lea.sflag [#allocation6], %s260
          %s262 = sand.u32 %s122, 1
          %s263 = smul.addr %s262, 128
          %s264 = scalar_lea.vmem [#allocation7], %s263
          %s266 = ssub.s32 2048, 2048
          %267 = vsyncadd %s261, %s266
          %s268 = smul.addr %s27, 16
          %s269 = smul.addr %s268, 128
          %s270 = scalar_lea.hbm %s3, %s269
          %s271 = sshll.u32 %s264, 4
          %s272 = int_to_ptr.vmem [resolvable:$true] %s271
          %277 = dma.hbm_to_vmem [thread:$0]  %s270, 2048, %s272, %s261, 128, 128, 8
        $region32: #{tpu_custom_call.1} parent=15 // pred_fallthru
          _
        // Predicated region
        $region33: #{tpu_custom_call.1} parent=15 // pred_check
          %p278 = pneg %p158
        $region34: #{tpu_custom_call.1} parent=15 // pred_check_branch
          %280 = sbr.rel (%p278) target = $region36
        $region35: #{tpu_custom_call.1} parent=15 // pred_region
          %p281 = scmp.lt.s32.totalorder %s27, 1
          %s282 = scalar_select %p281, %s27, 1
          %s283 = scalar_lea.vmem %s4, %s282
        $region36: #{tpu_custom_call.1} parent=15 // pred_fallthru
          _
      $region16: #{tpu_custom_call.1} parent=5 // pred_fallthru
        _
      %p284 = scmp.le.s32.totalorder 1, %s20
      %p285 = scmp.lt.s32.totalorder %s20, 3
      %p286 = pnand %p284, %p285
      %p287 = pneg %p286
      // Predicated region
      $region37: #{tpu_custom_call.1} parent=5 // pred_check
        _
      $region38: #{tpu_custom_call.1} parent=5 // pred_check_branch
        %289 = sbr.rel (%p286) target = $region40
      $region39: #{tpu_custom_call.1} parent=5 // pred_region
        %s290 = ssub.s32 %s20, 1
        %s291 = sand.u32 %s47, 1
        %s292 = scalar_lea.sflag [#allocation3], %s291
        %s293 = sand.u32 %s47, 1
        %s294 = smul.addr %s293, 8
        %s295 = scalar_lea.vmem [#allocation2], %s294
        // Predicated region
        $region41: #{tpu_custom_call.1} parent=39 // pred_check
          %p296 = pneg %p60
        $region42: #{tpu_custom_call.1} parent=39 // pred_check_branch
          %298 = sbr.rel (%p296) target = $region44
        $region43: #{tpu_custom_call.1} parent=39 // pred_region
          %299 = dma.done %s292, 128
        $region44: #{tpu_custom_call.1} parent=39 // pred_fallthru
          _
        %s300 = sand.u32 %s25, 1
        %s301 = scalar_lea.sflag [#allocation6], %s300
        %s302 = sand.u32 %s73, 1
        %s303 = smul.addr %s302, 128
        %s304 = scalar_lea.vmem [#allocation5], %s303
        // Predicated region
        $region45: #{tpu_custom_call.1} parent=39 // pred_check
          %p305 = pneg %p86
        $region46: #{tpu_custom_call.1} parent=39 // pred_check_branch
          %307 = sbr.rel (%p305) target = $region48
        $region47: #{tpu_custom_call.1} parent=39 // pred_region
          %308 = dma.done %s301, 2048
        $region48: #{tpu_custom_call.1} parent=39 // pred_fallthru
          _
        %s309 = sand.u32 %s25, 1
        %s310 = scalar_lea.sflag [#allocation6], %s309
        %s311 = sand.u32 %s125, 1
        %s312 = smul.addr %s311, 128
        %s313 = scalar_lea.vmem [#allocation7], %s312
        // Predicated region
        $region49: #{tpu_custom_call.1} parent=39 // pred_check
          %p314 = pneg %p138
        $region50: #{tpu_custom_call.1} parent=39 // pred_check_branch
          %316 = sbr.rel (%p314) target = $region52
        $region51: #{tpu_custom_call.1} parent=39 // pred_region
          %317 = dma.done %s310, 2048
        $region52: #{tpu_custom_call.1} parent=39 // pred_fallthru
          _
        %s318 = sand.u32 %s47, 1
        %s319 = scalar_lea.sflag [#allocation3], %s318
        %s320 = sand.u32 %s47, 1
        %s321 = smul.addr %s320, 8
        %s322 = scalar_lea.vmem [#allocation2], %s321
        %p323 = pneg %p60
        %p324 = pneg %p57
        %s325 = sand.u32 %s25, 1
        %s326 = scalar_lea.sflag [#allocation6], %s325
        %s327 = sand.u32 %s73, 1
        %s328 = smul.addr %s327, 128
        %s329 = scalar_lea.vmem [#allocation5], %s328
        %p330 = pneg %p86
        %p331 = pneg %p83
        %p332 = scmp.lt.s32.totalorder %s29, 1
        %s333 = scalar_select %p332, %s29, 1
        %s334 = scalar_lea.vmem %s2, %s333
        %p335 = pneg %p112
        %p336 = pneg %p109
        %s337 = sand.u32 %s25, 1
        %s338 = scalar_lea.sflag [#allocation6], %s337
        %s339 = sand.u32 %s125, 1
        %s340 = smul.addr %s339, 128
        %s341 = scalar_lea.vmem [#allocation7], %s340
        %p342 = pneg %p138
        %p343 = pneg %p135
        %p344 = scmp.lt.s32.totalorder %s29, 1
        %s345 = scalar_select %p344, %s29, 1
        %s346 = scalar_lea.vmem %s4, %s345
        %p347 = pneg %p164
        %p348 = pneg %p161
        %p349 = pneg %p192
        %p350 = pneg %p189
        %s351 = sand.u32 %s179, 1
        %s352 = scalar_lea.sflag [#allocation4], %s351
        %s353 = sand.u32 %s179, 1
        %s354 = smul.addr %s353, 8
        %s355 = scalar_lea.vmem [#allocation8], %s354
        %p356 = scmp.lt.s32.totalorder %s29, 1
        %s357 = scalar_select %p356, %s29, 1
        %s358 = scalar_lea.vmem %s2, %s357
        %p359 = scmp.lt.s32.totalorder %s29, 1
        %s360 = scalar_select %p359, %s29, 1
        %s361 = scalar_lea.vmem %s4, %s360
        %v362 = vld [vmem:[%s295] sm:$0xff]
        %v363 = vld [vmem:[%s304] sm:$0xff]
        %v364 = vld [vmem:[%s304 + $0x8] sm:$0xff]
        %v365 = vld [vmem:[%s304 + $0x10] sm:$0xff]
        %v366 = vld [vmem:[%s304 + $0x18] sm:$0xff]
        %v367 = vld [vmem:[%s304 + $0x20] sm:$0xff]
        %v368 = vld [vmem:[%s304 + $0x28] sm:$0xff]
        %v369 = vld [vmem:[%s304 + $0x30] sm:$0xff]
        %v370 = vld [vmem:[%s304 + $0x38] sm:$0xff]
        %v371 = vld [vmem:[%s304 + $0x40] sm:$0xff]
        %v372 = vld [vmem:[%s304 + $0x48] sm:$0xff]
        %v373 = vld [vmem:[%s304 + $0x50] sm:$0xff]
        %v374 = vld [vmem:[%s304 + $0x58] sm:$0xff]
        %v375 = vld [vmem:[%s304 + $0x60] sm:$0xff]
        %v376 = vld [vmem:[%s304 + $0x68] sm:$0xff]
        %v377 = vld [vmem:[%s304 + $0x70] sm:$0xff]
        %v378 = vld [vmem:[%s304 + $0x78] sm:$0xff]
        %v379 = vld [vmem:[%s358] sm:$0x1]
        %v381 = vlaneseq
        %v382 = vshrl.u32 %v381, 7
        %v383 = vsub.s32 0, %v382
        %v384 = vrot.slane %v379, %v383
        %386 = vmatprep.subr.mxu0 0.0
        %387 = vmatpush1.msra.mxu0 %v363
        %388 = vmatprep.subr.mxu0 0.0
        %389 = vmatpush1.msra.mxu0 %v364
        %390 = vmatprep.subr.mxu0 0.0
        %391 = vmatpush1.msra.mxu0 %v365
        %392 = vmatprep.subr.mxu0 0.0
        %393 = vmatpush1.msra.mxu0 %v366
        %394 = vmatprep.subr.mxu0 0.0
        %395 = vmatpush1.msra.mxu0 %v367
        %396 = vmatprep.subr.mxu0 0.0
        %397 = vmatpush1.msra.mxu0 %v368
        %398 = vmatprep.subr.mxu0 0.0
        %399 = vmatpush1.msra.mxu0 %v369
        %400 = vmatprep.subr.mxu0 0.0
        %401 = vmatpush1.msra.mxu0 %v370
        %402 = vmatprep.subr.mxu0 0.0
        %403 = vmatpush1.msra.mxu0 %v371
        %404 = vmatprep.subr.mxu0 0.0
        %405 = vmatpush1.msra.mxu0 %v372
        %406 = vmatprep.subr.mxu0 0.0
        %407 = vmatpush1.msra.mxu0 %v373
        %408 = vmatprep.subr.mxu0 0.0
        %409 = vmatpush1.msra.mxu0 %v374
        %410 = vmatprep.subr.mxu0 0.0
        %411 = vmatpush1.msra.mxu0 %v375
        %412 = vmatprep.subr.mxu0 0.0
        %413 = vmatpush1.msra.mxu0 %v376
        %414 = vmatprep.subr.mxu0 0.0
        %415 = vmatpush1.msra.mxu0 %v377
        %416 = vmatprep.subr.mxu0 0.0
        %417 = vmatpush1.msra.mxu0 %v378
        %418 = vmatprep.subr.mxu0 0.0
        %419 = vmatpush1.msra.mxu0 0.0
        %420 = vmatprep.subr.mxu0 0.0
        %421 = vmatpush1.msra.mxu0 0.0
        %422 = vmatprep.subr.mxu0 0.0
        %423 = vmatpush1.msra.mxu0 0.0
        %424 = vmatprep.subr.mxu0 0.0
        %425 = vmatpush1.msra.mxu0 0.0
        %426 = vmatprep.subr.mxu0 0.0
        %427 = vmatpush1.msra.mxu0 0.0
        %428 = vmatprep.subr.mxu0 0.0
        %429 = vmatpush1.msra.mxu0 0.0
        %430 = vmatprep.subr.mxu0 0.0
        %431 = vmatpush1.msra.mxu0 0.0
        %432 = vmatprep.subr.mxu0 0.0
        %433 = vmatpush1.msra.mxu0 0.0
        %434 = vmatprep.subr.mxu0 0.0
        %435 = vmatpush1.msra.mxu0 0.0
        %436 = vmatprep.subr.mxu0 0.0
        %437 = vmatpush1.msra.mxu0 0.0
        %438 = vmatprep.subr.mxu0 0.0
        %439 = vmatpush1.msra.mxu0 0.0
        %440 = vmatprep.subr.mxu0 0.0
        %441 = vmatpush1.msra.mxu0 0.0
        %442 = vmatprep.subr.mxu0 0.0
        %443 = vmatpush1.msra.mxu0 0.0
        %444 = vmatprep.subr.mxu0 0.0
        %445 = vmatpush1.msra.mxu0 0.0
        %446 = vmatprep.subr.mxu0 0.0
        %447 = vmatpush1.msra.mxu0 0.0
        %448 = vmatprep.subr.mxu0 0.0
        %449 = vmatpush1.msra.mxu0 0.0
        %450 = vmatprep.mubr.f32.mxu0 0.0
        %451 = vmatmul.mubr.f32.gmra.mrb[0].mxu0 %v362
        %v452 = vpop.f32.mrb[0].mxu0
        %v453 = vadd.f32 %v384, %v452
        %v454 = vpop.f32.mrb[0].mxu0
        %455 = vdwg.mxu0
        %v456 = vmax.f32 %v453, 0.0
        %v457 = vld [vmem:[%s313] sm:$0xff]
        %v458 = vld [vmem:[%s313 + $0x8] sm:$0xff]
        %v459 = vld [vmem:[%s313 + $0x10] sm:$0xff]
        %v460 = vld [vmem:[%s313 + $0x18] sm:$0xff]
        %v461 = vld [vmem:[%s313 + $0x20] sm:$0xff]
        %v462 = vld [vmem:[%s313 + $0x28] sm:$0xff]
        %v463 = vld [vmem:[%s313 + $0x30] sm:$0xff]
        %v464 = vld [vmem:[%s313 + $0x38] sm:$0xff]
        %v465 = vld [vmem:[%s313 + $0x40] sm:$0xff]
        %v466 = vld [vmem:[%s313 + $0x48] sm:$0xff]
        %v467 = vld [vmem:[%s313 + $0x50] sm:$0xff]
        %v468 = vld [vmem:[%s313 + $0x58] sm:$0xff]
        %v469 = vld [vmem:[%s313 + $0x60] sm:$0xff]
        %v470 = vld [vmem:[%s313 + $0x68] sm:$0xff]
        %v471 = vld [vmem:[%s313 + $0x70] sm:$0xff]
        %v472 = vld [vmem:[%s313 + $0x78] sm:$0xff]
        %v473 = vld [vmem:[%s361] sm:$0x1]
        %v475 = vlaneseq
        %v476 = vshrl.u32 %v475, 7
        %v477 = vsub.s32 0, %v476
        %v478 = vrot.slane %v473, %v477
        %480 = vmatprep.subr.mxu0 0.0
        %481 = vmatpush1.msra.mxu0 %v457
        %482 = vmatprep.subr.mxu0 0.0
        %483 = vmatpush1.msra.mxu0 %v458
        %484 = vmatprep.subr.mxu0 0.0
        %485 = vmatpush1.msra.mxu0 %v459
        %486 = vmatprep.subr.mxu0 0.0
        %487 = vmatpush1.msra.mxu0 %v460
        %488 = vmatprep.subr.mxu0 0.0
        %489 = vmatpush1.msra.mxu0 %v461
        %490 = vmatprep.subr.mxu0 0.0
        %491 = vmatpush1.msra.mxu0 %v462
        %492 = vmatprep.subr.mxu0 0.0
        %493 = vmatpush1.msra.mxu0 %v463
        %494 = vmatprep.subr.mxu0 0.0
        %495 = vmatpush1.msra.mxu0 %v464
        %496 = vmatprep.subr.mxu0 0.0
        %497 = vmatpush1.msra.mxu0 %v465
        %498 = vmatprep.subr.mxu0 0.0
        %499 = vmatpush1.msra.mxu0 %v466
        %500 = vmatprep.subr.mxu0 0.0
        %501 = vmatpush1.msra.mxu0 %v467
        %502 = vmatprep.subr.mxu0 0.0
        %503 = vmatpush1.msra.mxu0 %v468
        %504 = vmatprep.subr.mxu0 0.0
        %505 = vmatpush1.msra.mxu0 %v469
        %506 = vmatprep.subr.mxu0 0.0
        %507 = vmatpush1.msra.mxu0 %v470
        %508 = vmatprep.subr.mxu0 0.0
        %509 = vmatpush1.msra.mxu0 %v471
        %510 = vmatprep.subr.mxu0 0.0
        %511 = vmatpush1.msra.mxu0 %v472
        %512 = vmatprep.subr.mxu0 0.0
        %513 = vmatpush1.msra.mxu0 0.0
        %514 = vmatprep.subr.mxu0 0.0
        %515 = vmatpush1.msra.mxu0 0.0
        %516 = vmatprep.subr.mxu0 0.0
        %517 = vmatpush1.msra.mxu0 0.0
        %518 = vmatprep.subr.mxu0 0.0
        %519 = vmatpush1.msra.mxu0 0.0
        %520 = vmatprep.subr.mxu0 0.0
        %521 = vmatpush1.msra.mxu0 0.0
        %522 = vmatprep.subr.mxu0 0.0
        %523 = vmatpush1.msra.mxu0 0.0
        %524 = vmatprep.subr.mxu0 0.0
        %525 = vmatpush1.msra.mxu0 0.0
        %526 = vmatprep.subr.mxu0 0.0
        %527 = vmatpush1.msra.mxu0 0.0
        %528 = vmatprep.subr.mxu0 0.0
        %529 = vmatpush1.msra.mxu0 0.0
        %530 = vmatprep.subr.mxu0 0.0
        %531 = vmatpush1.msra.mxu0 0.0
        %532 = vmatprep.subr.mxu0 0.0
        %533 = vmatpush1.msra.mxu0 0.0
        %534 = vmatprep.subr.mxu0 0.0
        %535 = vmatpush1.msra.mxu0 0.0
        %536 = vmatprep.subr.mxu0 0.0
        %537 = vmatpush1.msra.mxu0 0.0
        %538 = vmatprep.subr.mxu0 0.0
        %539 = vmatpush1.msra.mxu0 0.0
        %540 = vmatprep.subr.mxu0 0.0
        %541 = vmatpush1.msra.mxu0 0.0
        %542 = vmatprep.subr.mxu0 0.0
        %543 = vmatpush1.msra.mxu0 0.0
        %544 = vmatprep.mubr.f32.mxu0 0.0
        %545 = vmatmul.mubr.f32.gmra.mrb[0].mxu0 %v456
        %v546 = vpop.f32.mrb[0].mxu0
        %v547 = vadd.f32 %v478, %v546
        %v548 = vpop.f32.mrb[0].mxu0
        %549 = vdwg.mxu0
        %v550 = vmul.f32 %v547, %v547
        %551 = vadd.xlane.f32.xlu0 %v550
        %v552 = vpop.xlane.xlu0 %551
        %v553 = vmax.f32 %v552, 1e-24
        %v554 = vrsqrt.pop %v553
        %v555 = vmul.f32 %v547, %v554
        %556 = vst [vmem:[%s355] sm:$0xff] %v555
        %s557 = sand.u32 %s179, 1
        %s558 = scalar_lea.sflag [#allocation4], %s557
        %s559 = sand.u32 %s179, 1
        %s560 = smul.addr %s559, 8
        %s561 = scalar_lea.vmem [#allocation8], %s560
        // Predicated region
        $region53: #{tpu_custom_call.1} parent=39 // pred_check
          %p562 = pneg %p189
        $region54: #{tpu_custom_call.1} parent=39 // pred_check_branch
          %564 = sbr.rel (%p562) target = $region56
        $region55: #{tpu_custom_call.1} parent=39 // pred_region
          %s566 = ssub.s32 128, 128
          %567 = vsyncadd %s558, %s566
          %s568 = sadd.s32 %s30, %s29
          %s569 = smul.addr %s568, 128
          %s570 = scalar_lea.hbm %s5, %s569
          %s572 = sshll.u32 %s561, 4
          %s573 = int_to_ptr.vmem [resolvable:$true] %s572
          %575 = dma.vmem_to_hbm [thread:$0]  %s573, 128, %s570, %s558
        $region56: #{tpu_custom_call.1} parent=39 // pred_fallthru
          _
      $region40: #{tpu_custom_call.1} parent=5 // pred_fallthru
        _
      %p576 = scmp.le.s32.totalorder 2, %s20
      // Predicated region
      $region57: #{tpu_custom_call.1} parent=5 // pred_check
        %p577 = pneg %p576
      $region58: #{tpu_custom_call.1} parent=5 // pred_check_branch
        %579 = sbr.rel (%p577) target = $region60
      $region59: #{tpu_custom_call.1} parent=5 // pred_region
        %s580 = ssub.s32 %s20, 2
        // Predicated region
        $region61: #{tpu_custom_call.1} parent=59 // pred_check
          %p581 = pneg %p195
        $region62: #{tpu_custom_call.1} parent=59 // pred_check_branch
          %583 = sbr.rel (%p581) target = $region64
        $region63: #{tpu_custom_call.1} parent=59 // pred_region
          %s584 = sand.u32 %s180, 1
          %s585 = scalar_lea.sflag [#allocation4], %s584
          %s586 = sand.u32 %s180, 1
          %s587 = smul.addr %s586, 8
          %s588 = scalar_lea.vmem [#allocation8], %s587
          %589 = dma.done %s585, 128
        $region64: #{tpu_custom_call.1} parent=59 // pred_fallthru
          _
      $region60: #{tpu_custom_call.1} parent=5 // pred_fallthru
        _
    $region6: #{tpu_custom_call.1} parent=1 // loop_footer
      %s24 = sadd.s32 1, %s20
    $region7: #{tpu_custom_call.1} parent=1 // loop_footer_branch
      %19 = sbr.rel target = $region3
    $region8: #{tpu_custom_call.1} parent=1 // loop_exit
      _
    %590 = vsyncpa [#allocation3], 1
    %s591 = scalar_lea.sflag [#allocation3], 1
    %592 = vsyncpa %s591, 1
    %593 = vsyncpa [#allocation6], 1
    %s594 = scalar_lea.sflag [#allocation6], 1
    %595 = vsyncpa %s594, 1
    %596 = vsyncpa [#allocation4], 1
    %s597 = scalar_lea.sflag [#allocation4], 1
    %598 = vsyncpa %s597, 1

</llo_original>
